<compile_context>
chip_gen: v5e
topology: v5e:2x2
jax: 0.10.0
libtpu: 0.0.40
codegen_flags: <defaults>
</compile_context>

<pallas_src>
import numpy as np
import jax
import jax.numpy as jnp
from jax import lax
from jax.experimental import pallas as pl
from jax.experimental.pallas import tpu as pltpu


# ----------------------------------------------------------------------------
# Bilinear resize (PyTorch F.interpolate, mode='bilinear', align_corners=False)
# along one axis, expressed as static 2-tap rows / a dense matrix.
# ----------------------------------------------------------------------------
def bilinear_resize_taps(in_size, out_size):
    """Per output row: (i0, i1, c0, c1) with out[o] = c0*in[i0] + c1*in[i1]."""
    if in_size == out_size:
        return [(o, o, 1.0, 0.0) for o in range(out_size)]
    taps = []
    scale = in_size / out_size
    for o in range(out_size):
        src = max((o + 0.5) * scale - 0.5, 0.0)
        i0 = min(int(np.floor(src)), in_size - 1)
        i1 = min(i0 + 1, in_size - 1)
        frac = src - i0
        taps.append((i0, i1, 1.0 - frac, frac))
    return taps


def bilinear_resize_matrix(in_size, out_size):
    m = np.zeros((out_size, in_size), dtype=np.float32)
    for o, (i0, i1, c0, c1) in enumerate(bilinear_resize_taps(in_size, out_size)):
        m[o, i0] += c0
        m[o, i1] += c1
    return m


def _pick_batch_tile(N, max_tile=8):
    # Amortize the ~0.35us per-grid-step overhead while keeping >= 2 parallel
    # grid steps (so a v7x chip can shard the grid across its 2 TensorCores).
    for bt in range(min(max_tile, max(N // 2, 1)), 0, -1):
        if N % bt == 0:
            return bt
    return 1


# ----------------------------------------------------------------------------
# Kernel
# ----------------------------------------------------------------------------
def _make_kernel(batch_tile, F_in, F_out, H, W, K, E, H_out, taps):
    HW = H * W
    HOW = H_out * W
    p = K // 2

    def kernel(x_ref, w1_ref, w2_ref, ws_ref, mask_ref, bias_ref, o_ref):
        w1 = w1_ref[...]            # (F_out, K*F_in)  conv1 weight, bn1 scale folded
        w2 = w2_ref[...]            # (F_out, E)       depthwise weight, bn2 scale folded
        b1 = bias_ref[:, 0:1]       # (F_out, 1)       bn1 shift
        b2 = bias_ref[:, 1:2]       # (F_out, 1)       bn2 shift

        for b in range(batch_tile):
            x = x_ref[b]            # (F_in, H*W), time on lanes within each electrode row

            # ---- shortcut: bilinear resize over electrodes (static 2-tap rows),
            #      then the 1x1 channel-mixing conv as a single MXU dot.
            if H_out == H:
                xr = x
            else:
                parts = []
                for g in range(H_out):
                    i0, i1, c0, c1 = taps[g]
                    s0 = x[:, i0 * W:(i0 + 1) * W]
                    s1 = x[:, i1 * W:(i1 + 1) * W]
                    parts.append(c0 * s0 + c1 * s1)
                xr = parts[0] if H_out == 1 else jnp.concatenate(parts, axis=1)
            if F_in != F_out:
                res = jnp.dot(ws_ref[...], xr, preferred_element_type=jnp.float32)
            else:
                res = xr            # nn.Identity shortcut -> skip the matmul

            # ---- conv1: temporal (1,K) conv as ONE MXU matmul over an im2col
            #      operand built with flat lane shifts + halo masks (no reshape).
            if p > 0:
                zp = jnp.zeros((F_in, p), jnp.float32)
                xpad = jnp.concatenate([zp, x, zp], axis=1)        # (F_in, HW + 2p)
            else:
                xpad = x
            cols = []
            for k in range(K):
                c = xpad[:, k:k + HW]
                if k != p:
                    # zero the lanes whose shift crossed an electrode-row boundary
                    c = c * mask_ref[k:k + 1, :]
                cols.append(c)
            xs = cols[0] if K == 1 else jnp.concatenate(cols, axis=0)   # (K*F_in, HW)
            a1 = jnp.dot(w1, xs, preferred_element_type=jnp.float32) + b1

            # ---- ELU (bn1 scale/shift already folded); exp only sees x <= 0 ----
            a1 = jnp.where(a1 > 0.0, a1, jnp.exp(jnp.minimum(a1, 0.0)) - 1.0)

            # ---- conv2: depthwise (n_electrodes, 1) conv; per-channel weights,
            #      contiguous lane slices of the flat slab (VPU MACs).
            # TODO(synk): for large n_electrodes switch to lax.fori_loop(unroll=True).
            y = w2[:, 0:1] * a1[:, 0:HOW]
            for e in range(1, E):
                y = y + w2[:, e:e + 1] * a1[:, e * W:e * W + HOW]

            # ---- bn2 shift + residual add, lane-dense store ----
            o_ref[b] = (y + b2 + res).astype(o_ref.dtype)

    return kernel


# ----------------------------------------------------------------------------
# Wrapper
# ----------------------------------------------------------------------------
def eegnet_residual_block(x, params, eps=1e-5, batch_tile=None):
    N, F_in, H, W = x.shape
    w1 = params['w1'].astype(jnp.float32)          # (F_out, F_in, K)
    F_out, _, K = w1.shape
    w2 = params['w2'].astype(jnp.float32)          # (F_out, E)
    E = w2.shape[1]
    assert K % 2 == 1, "PyTorch module only adds cleanly when K is odd"
    p = K // 2
    H_out = H - E + 1
    assert H_out >= 1
    HW, HOW = H * W, H_out * W

    # Fold BatchNorm (eval mode, running stats) scale into the conv weights;
    # only the per-channel shifts survive (packed into one (F_out, 2) array).
    inv1 = params['g1'] / jnp.sqrt(params['v1'] + eps)
    inv2 = params['g2'] / jnp.sqrt(params['v2'] + eps)
    # conv1 weight flattened k-major to match the in-kernel im2col row order.
    w1f = (jnp.transpose(w1, (0, 2, 1)).reshape(F_out, K * F_in) * inv1[:, None])
    w2f = w2 * inv2[:, None]
    bias = jnp.stack([params['b1'] - params['m1'] * inv1,
                      params['b2'] - params['m2'] * inv2], axis=1)   # (F_out, 2)
    ws = params['ws'].astype(jnp.float32)                            # (F_out, F_in)

    # Validity mask for the flat im2col shifts (zeros where a lane shift would
    # cross an electrode-row boundary -> emulates padding=(0, K//2)).
    wcol = np.arange(HW) % W
    mask_np = np.zeros((K, HW), np.float32)
    for k in range(K):
        s = k - p
        mask_np[k] = ((wcol + s >= 0) & (wcol + s < W)).astype(np.float32)
    mask = jnp.asarray(mask_np)

    taps = bilinear_resize_taps(H, H_out)

    if batch_tile is None:
        batch_tile = _pick_batch_tile(N)
    assert N % batch_tile == 0
    grid = (N // batch_tile,)

    # Free (contiguous) reshape: (N, F_in, H, W) -> (N, F_in, H*W). No jnp.pad.
    x_flat = x.reshape(N, F_in, HW).astype(jnp.float32)

    kernel = _make_kernel(batch_tile, F_in, F_out, H, W, K, E, H_out, taps)

    out_flat = pl.pallas_call(
        kernel,
        out_shape=jax.ShapeDtypeStruct((N, F_out, HOW), jnp.float32),
        grid=grid,
        in_specs=[
            pl.BlockSpec((batch_tile, F_in, HW), lambda n: (n, 0, 0)),   # x (flat)
            pl.BlockSpec((F_out, K * F_in), lambda n: (0, 0)),           # conv1 (folded)
            pl.BlockSpec((F_out, E), lambda n: (0, 0)),                  # conv2 (folded)
            pl.BlockSpec((F_out, F_in), lambda n: (0, 0)),               # shortcut 1x1
            pl.BlockSpec((K, HW), lambda n: (0, 0)),                     # halo masks
            pl.BlockSpec((F_out, 2), lambda n: (0, 0)),                  # bn shifts
        ],
        out_specs=pl.BlockSpec((batch_tile, F_out, HOW), lambda n: (n, 0, 0)),
        compiler_params=pltpu.CompilerParams(dimension_semantics=("parallel",)),
    )(x_flat, w1f, w2f, ws, mask, bias)

    return out_flat.reshape(N, F_out, H_out, W)


# ----------------------------------------------------------------------------
# Parameters + pure-JAX reference (eval-mode BN), for the correctness check.
# ----------------------------------------------------------------------------
def init_params(key, F_in, F_out, K, n_electrodes):
    ks = jax.random.split(key, 11)

    def nrm(k, shape, scale):
        return (scale * jax.random.normal(k, shape)).astype(jnp.float32)

    return dict(
        w1=nrm(ks[0], (F_out, F_in, K), 0.3),                 # conv1 (F_out,F_in,1,K) squeezed
        w2=nrm(ks[1], (F_out, n_electrodes), 0.3),            # conv2 (F_out,1,E,1) squeezed
        ws=(nrm(ks[2], (F_out, F_in), 0.3) if F_in != F_out
            else jnp.eye(F_in, dtype=jnp.float32)),           # shortcut (identity if F_in==F_out)
        g1=(1.0 + nrm(ks[3], (F_out,), 0.1)),
        b1=nrm(ks[4], (F_out,), 0.1),
        m1=nrm(ks[5], (F_out,), 0.1),
        v1=jax.random.uniform(ks[6], (F_out,), minval=0.5, maxval=1.5).astype(jnp.float32),
        g2=(1.0 + nrm(ks[7], (F_out,), 0.1)),
        b2=nrm(ks[8], (F_out,), 0.1),
        m2=nrm(ks[9], (F_out,), 0.1),
        v2=jax.random.uniform(ks[10], (F_out,), minval=0.5, maxval=1.5).astype(jnp.float32),
    )


def reference_forward(x, params, eps=1e-5):
    """Pure-JAX reference matching the PyTorch forward (eval-mode BN)."""
    F_out, F_in, K = params['w1'].shape
    dn = ('NCHW', 'OIHW', 'NCHW')
    hp = lax.Precision.HIGHEST

    y = lax.conv_general_dilated(x, params['w1'][:, :, None, :], (1, 1),
                                 ((0, 0), (K // 2, K // 2)),
                                 dimension_numbers=dn, precision=hp)
    y = ((y - params['m1'][None, :, None, None]) /
         jnp.sqrt(params['v1'] + eps)[None, :, None, None] *
         params['g1'][None, :, None, None] + params['b1'][None, :, None, None])
    y = jnp.where(y > 0, y, jnp.exp(y) - 1.0)

    y = lax.conv_general_dilated(y, params['w2'][:, None, :, None], (1, 1),
                                 ((0, 0), (0, 0)), dimension_numbers=dn,
                                 feature_group_count=F_out, precision=hp)
    y = ((y - params['m2'][None, :, None, None]) /
         jnp.sqrt(params['v2'] + eps)[None, :, None, None] *
         params['g2'][None, :, None, None] + params['b2'][None, :, None, None])

    if F_in != F_out:
        res = lax.conv_general_dilated(x, params['ws'][:, :, None, None], (1, 1),
                                       ((0, 0), (0, 0)), dimension_numbers=dn,
                                       precision=hp)
    else:
        res = x
    if res.shape[2] != y.shape[2]:
        wi = jnp.asarray(bilinear_resize_matrix(res.shape[2], y.shape[2]), jnp.float32)
        res = jnp.einsum('gh,nchw->ncgw', wi, res)
    return y + res


if __name__ == "__main__":
    # Small shapes consistent with the module: (N, F_in, n_electrodes, T)
    N, F_in, F_out, K, E, T = 2, 4, 8, 5, 16, 16

    key = jax.random.PRNGKey(0)
    kx, kp = jax.random.split(key)
    x = jax.random.normal(kx, (N, F_in, E, T), dtype=jnp.float32)
    params = init_params(kp, F_in, F_out, K, E)

    out = jax.block_until_ready(eegnet_residual_block(x, params))
    ref = jax.block_until_ready(reference_forward(x, params))

    assert out.shape == ref.shape, (out.shape, ref.shape)
    if not np.allclose(np.asarray(out), np.asarray(ref), rtol=2e-4, atol=2e-4):
        raise AssertionError(
            f"mismatch vs reference, max abs err = {float(jnp.max(jnp.abs(out - ref)))}")

    print("KERNEL_OK")
</pallas_src>

<mosaic_0001>
module attributes {stable_mosaic.version = 11 : i64} {
  func.func @kernel(%arg0: i32, %arg1: memref<1x4x256xf32, #tpu.memory_space<vmem>>, %arg2: memref<8x20xf32, #tpu.memory_space<vmem>>, %arg3: memref<8x16xf32, #tpu.memory_space<vmem>>, %arg4: memref<8x4xf32, #tpu.memory_space<vmem>>, %arg5: memref<5x256xf32, #tpu.memory_space<vmem>>, %arg6: memref<8x2xf32, #tpu.memory_space<vmem>>, %arg7: memref<1x8x16xf32, #tpu.memory_space<vmem>>) attributes {dimension_semantics = [#tpu.dimension_semantics<parallel>], iteration_bounds = array<i64: 2>, scalar_prefetch = 0 : i64, scratch_operands = 0 : i64, tpu.core_type = #tpu.core_type<tc>, window_params = [{transform_indices = @transform_0, window_bounds = array<i64: 1, 4, 256>}, {pipeline_mode = #tpu.pipeline_mode<synchronous>, transform_indices = @transform_1, window_bounds = array<i64: 8, 20>}, {pipeline_mode = #tpu.pipeline_mode<synchronous>, transform_indices = @transform_2, window_bounds = array<i64: 8, 16>}, {pipeline_mode = #tpu.pipeline_mode<synchronous>, transform_indices = @transform_3, window_bounds = array<i64: 8, 4>}, {pipeline_mode = #tpu.pipeline_mode<synchronous>, transform_indices = @transform_4, window_bounds = array<i64: 5, 256>}, {pipeline_mode = #tpu.pipeline_mode<synchronous>, transform_indices = @transform_5, window_bounds = array<i64: 8, 2>}, {transform_indices = @transform_6, window_bounds = array<i64: 1, 8, 16>}]} {
    %c0 = arith.constant 0 : index
    %c0_0 = arith.constant 0 : index
    %0 = vector.load %arg2[%c0, %c0_0] : memref<8x20xf32, #tpu.memory_space<vmem>>, vector<8x20xf32>
    %c0_1 = arith.constant 0 : index
    %c0_2 = arith.constant 0 : index
    %1 = vector.load %arg3[%c0_1, %c0_2] : memref<8x16xf32, #tpu.memory_space<vmem>>, vector<8x16xf32>
    %c0_3 = arith.constant 0 : index
    %c0_4 = arith.constant 0 : index
    %2 = vector.load %arg6[%c0_3, %c0_4] : memref<8x2xf32, #tpu.memory_space<vmem>>, vector<8x1xf32>
    %c0_5 = arith.constant 0 : index
    %c1 = arith.constant 1 : index
    %3 = vector.load %arg6[%c0_5, %c1] : memref<8x2xf32, #tpu.memory_space<vmem>>, vector<8x1xf32>
    %c0_6 = arith.constant 0 : index
    %c0_7 = arith.constant 0 : index
    %c0_8 = arith.constant 0 : index
    %4 = vector.load %arg1[%c0_6, %c0_7, %c0_8] : memref<1x4x256xf32, #tpu.memory_space<vmem>>, vector<1x4x256xf32>
    %5 = vector.shape_cast %4 : vector<1x4x256xf32> to vector<4x256xf32>
    %6 = vector.extract_strided_slice %5 {offsets = [0, 112], sizes = [4, 16], strides = [1, 1]} : vector<4x256xf32> to vector<4x16xf32>
    %7 = vector.extract_strided_slice %5 {offsets = [0, 128], sizes = [4, 16], strides = [1, 1]} : vector<4x256xf32> to vector<4x16xf32>
    %cst = arith.constant 5.000000e-01 : f32
    %8 = vector.broadcast %cst : f32 to vector<4x16xf32>
    %9 = arith.mulf %8, %6 : vector<4x16xf32>
    %cst_9 = arith.constant 5.000000e-01 : f32
    %10 = vector.broadcast %cst_9 : f32 to vector<4x16xf32>
    %11 = arith.mulf %10, %7 : vector<4x16xf32>
    %12 = arith.addf %9, %11 : vector<4x16xf32>
    %c0_10 = arith.constant 0 : index
    %c0_11 = arith.constant 0 : index
    %13 = vector.load %arg4[%c0_10, %c0_11] : memref<8x4xf32, #tpu.memory_space<vmem>>, vector<8x4xf32>
    %cst_12 = arith.constant dense<0.000000e+00> : vector<8x16xf32>
    %14 = tpu.matmul %13, %12, %cst_12 {dimension_numbers = #tpu.dot_dimension_numbers<[1], [0], [0], [1], [0, 0, 1, 1], [], []>} : vector<8x4xf32>, vector<4x16xf32>, vector<8x16xf32> -> vector<8x16xf32>
    %cst_13 = arith.constant 0.000000e+00 : f32
    %15 = vector.broadcast %cst_13 : f32 to vector<4x2xf32>
    %16 = tpu.concatenate %15, %5, %15 in 1 : vector<4x2xf32>, vector<4x256xf32>, vector<4x2xf32> -> vector<4x260xf32>
    %17 = vector.extract_strided_slice %16 {offsets = [0, 0], sizes = [4, 256], strides = [1, 1]} : vector<4x260xf32> to vector<4x256xf32>
    %c0_14 = arith.constant 0 : index
    %c0_15 = arith.constant 0 : index
    %18 = vector.load %arg5[%c0_14, %c0_15] : memref<5x256xf32, #tpu.memory_space<vmem>>, vector<1x256xf32>
    %19 = vector.broadcast %18 : vector<1x256xf32> to vector<4x256xf32>
    %20 = arith.mulf %17, %19 : vector<4x256xf32>
    %21 = vector.extract_strided_slice %16 {offsets = [0, 1], sizes = [4, 256], strides = [1, 1]} : vector<4x260xf32> to vector<4x256xf32>
    %c1_16 = arith.constant 1 : index
    %c0_17 = arith.constant 0 : index
    %22 = vector.load %arg5[%c1_16, %c0_17] : memref<5x256xf32, #tpu.memory_space<vmem>>, vector<1x256xf32>
    %23 = vector.broadcast %22 : vector<1x256xf32> to vector<4x256xf32>
    %24 = arith.mulf %21, %23 : vector<4x256xf32>
    %25 = vector.extract_strided_slice %16 {offsets = [0, 2], sizes = [4, 256], strides = [1, 1]} : vector<4x260xf32> to vector<4x256xf32>
    %26 = vector.extract_strided_slice %16 {offsets = [0, 3], sizes = [4, 256], strides = [1, 1]} : vector<4x260xf32> to vector<4x256xf32>
    %c3 = arith.constant 3 : index
    %c0_18 = arith.constant 0 : index
    %27 = vector.load %arg5[%c3, %c0_18] : memref<5x256xf32, #tpu.memory_space<vmem>>, vector<1x256xf32>
    %28 = vector.broadcast %27 : vector<1x256xf32> to vector<4x256xf32>
    %29 = arith.mulf %26, %28 : vector<4x256xf32>
    %30 = vector.extract_strided_slice %16 {offsets = [0, 4], sizes = [4, 256], strides = [1, 1]} : vector<4x260xf32> to vector<4x256xf32>
    %c4 = arith.constant 4 : index
    %c0_19 = arith.constant 0 : index
    %31 = vector.load %arg5[%c4, %c0_19] : memref<5x256xf32, #tpu.memory_space<vmem>>, vector<1x256xf32>
    %32 = vector.broadcast %31 : vector<1x256xf32> to vector<4x256xf32>
    %33 = arith.mulf %30, %32 : vector<4x256xf32>
    %34 = tpu.concatenate %20, %24, %25, %29, %33 in 0 : vector<4x256xf32>, vector<4x256xf32>, vector<4x256xf32>, vector<4x256xf32>, vector<4x256xf32> -> vector<20x256xf32>
    %cst_20 = arith.constant dense<0.000000e+00> : vector<8x256xf32>
    %35 = tpu.matmul %0, %34, %cst_20 {dimension_numbers = #tpu.dot_dimension_numbers<[1], [0], [0], [1], [0, 0, 1, 1], [], []>} : vector<8x20xf32>, vector<20x256xf32>, vector<8x256xf32> -> vector<8x256xf32>
    %36 = vector.broadcast %2 : vector<8x1xf32> to vector<8x256xf32>
    %37 = arith.addf %35, %36 : vector<8x256xf32>
    %cst_21 = arith.constant 0.000000e+00 : f32
    %38 = vector.broadcast %cst_21 : f32 to vector<8x256xf32>
    %39 = arith.cmpf ogt, %37, %38 : vector<8x256xf32>
    %cst_22 = arith.constant 0.000000e+00 : f32
    %40 = vector.broadcast %cst_22 : f32 to vector<8x256xf32>
    %41 = arith.minimumf %37, %40 : vector<8x256xf32>
    %42 = math.exp %41 : vector<8x256xf32>
    %cst_23 = arith.constant 1.000000e+00 : f32
    %43 = vector.broadcast %cst_23 : f32 to vector<8x256xf32>
    %44 = arith.subf %42, %43 : vector<8x256xf32>
    %45 = arith.select %39, %37, %44 : vector<8x256xi1>, vector<8x256xf32>
    %46 = vector.extract_strided_slice %1 {offsets = [0, 0], sizes = [8, 1], strides = [1, 1]} : vector<8x16xf32> to vector<8x1xf32>
    %47 = vector.extract_strided_slice %45 {offsets = [0, 0], sizes = [8, 16], strides = [1, 1]} : vector<8x256xf32> to vector<8x16xf32>
    %48 = vector.broadcast %46 : vector<8x1xf32> to vector<8x16xf32>
    %49 = arith.mulf %48, %47 : vector<8x16xf32>
    %50 = vector.extract_strided_slice %1 {offsets = [0, 1], sizes = [8, 1], strides = [1, 1]} : vector<8x16xf32> to vector<8x1xf32>
    %51 = vector.extract_strided_slice %45 {offsets = [0, 16], sizes = [8, 16], strides = [1, 1]} : vector<8x256xf32> to vector<8x16xf32>
    %52 = vector.broadcast %50 : vector<8x1xf32> to vector<8x16xf32>
    %53 = arith.mulf %52, %51 : vector<8x16xf32>
    %54 = arith.addf %49, %53 : vector<8x16xf32>
    %55 = vector.extract_strided_slice %1 {offsets = [0, 2], sizes = [8, 1], strides = [1, 1]} : vector<8x16xf32> to vector<8x1xf32>
    %56 = vector.extract_strided_slice %45 {offsets = [0, 32], sizes = [8, 16], strides = [1, 1]} : vector<8x256xf32> to vector<8x16xf32>
    %57 = vector.broadcast %55 : vector<8x1xf32> to vector<8x16xf32>
    %58 = arith.mulf %57, %56 : vector<8x16xf32>
    %59 = arith.addf %54, %58 : vector<8x16xf32>
    %60 = vector.extract_strided_slice %1 {offsets = [0, 3], sizes = [8, 1], strides = [1, 1]} : vector<8x16xf32> to vector<8x1xf32>
    %61 = vector.extract_strided_slice %45 {offsets = [0, 48], sizes = [8, 16], strides = [1, 1]} : vector<8x256xf32> to vector<8x16xf32>
    %62 = vector.broadcast %60 : vector<8x1xf32> to vector<8x16xf32>
    %63 = arith.mulf %62, %61 : vector<8x16xf32>
    %64 = arith.addf %59, %63 : vector<8x16xf32>
    %65 = vector.extract_strided_slice %1 {offsets = [0, 4], sizes = [8, 1], strides = [1, 1]} : vector<8x16xf32> to vector<8x1xf32>
    %66 = vector.extract_strided_slice %45 {offsets = [0, 64], sizes = [8, 16], strides = [1, 1]} : vector<8x256xf32> to vector<8x16xf32>
    %67 = vector.broadcast %65 : vector<8x1xf32> to vector<8x16xf32>
    %68 = arith.mulf %67, %66 : vector<8x16xf32>
    %69 = arith.addf %64, %68 : vector<8x16xf32>
    %70 = vector.extract_strided_slice %1 {offsets = [0, 5], sizes = [8, 1], strides = [1, 1]} : vector<8x16xf32> to vector<8x1xf32>
    %71 = vector.extract_strided_slice %45 {offsets = [0, 80], sizes = [8, 16], strides = [1, 1]} : vector<8x256xf32> to vector<8x16xf32>
    %72 = vector.broadcast %70 : vector<8x1xf32> to vector<8x16xf32>
    %73 = arith.mulf %72, %71 : vector<8x16xf32>
    %74 = arith.addf %69, %73 : vector<8x16xf32>
    %75 = vector.extract_strided_slice %1 {offsets = [0, 6], sizes = [8, 1], strides = [1, 1]} : vector<8x16xf32> to vector<8x1xf32>
    %76 = vector.extract_strided_slice %45 {offsets = [0, 96], sizes = [8, 16], strides = [1, 1]} : vector<8x256xf32> to vector<8x16xf32>
    %77 = vector.broadcast %75 : vector<8x1xf32> to vector<8x16xf32>
    %78 = arith.mulf %77, %76 : vector<8x16xf32>
    %79 = arith.addf %74, %78 : vector<8x16xf32>
    %80 = vector.extract_strided_slice %1 {offsets = [0, 7], sizes = [8, 1], strides = [1, 1]} : vector<8x16xf32> to vector<8x1xf32>
    %81 = vector.extract_strided_slice %45 {offsets = [0, 112], sizes = [8, 16], strides = [1, 1]} : vector<8x256xf32> to vector<8x16xf32>
    %82 = vector.broadcast %80 : vector<8x1xf32> to vector<8x16xf32>
    %83 = arith.mulf %82, %81 : vector<8x16xf32>
    %84 = arith.addf %79, %83 : vector<8x16xf32>
    %85 = vector.extract_strided_slice %1 {offsets = [0, 8], sizes = [8, 1], strides = [1, 1]} : vector<8x16xf32> to vector<8x1xf32>
    %86 = vector.extract_strided_slice %45 {offsets = [0, 128], sizes = [8, 16], strides = [1, 1]} : vector<8x256xf32> to vector<8x16xf32>
    %87 = vector.broadcast %85 : vector<8x1xf32> to vector<8x16xf32>
    %88 = arith.mulf %87, %86 : vector<8x16xf32>
    %89 = arith.addf %84, %88 : vector<8x16xf32>
    %90 = vector.extract_strided_slice %1 {offsets = [0, 9], sizes = [8, 1], strides = [1, 1]} : vector<8x16xf32> to vector<8x1xf32>
    %91 = vector.extract_strided_slice %45 {offsets = [0, 144], sizes = [8, 16], strides = [1, 1]} : vector<8x256xf32> to vector<8x16xf32>
    %92 = vector.broadcast %90 : vector<8x1xf32> to vector<8x16xf32>
    %93 = arith.mulf %92, %91 : vector<8x16xf32>
    %94 = arith.addf %89, %93 : vector<8x16xf32>
    %95 = vector.extract_strided_slice %1 {offsets = [0, 10], sizes = [8, 1], strides = [1, 1]} : vector<8x16xf32> to vector<8x1xf32>
    %96 = vector.extract_strided_slice %45 {offsets = [0, 160], sizes = [8, 16], strides = [1, 1]} : vector<8x256xf32> to vector<8x16xf32>
    %97 = vector.broadcast %95 : vector<8x1xf32> to vector<8x16xf32>
    %98 = arith.mulf %97, %96 : vector<8x16xf32>
    %99 = arith.addf %94, %98 : vector<8x16xf32>
    %100 = vector.extract_strided_slice %1 {offsets = [0, 11], sizes = [8, 1], strides = [1, 1]} : vector<8x16xf32> to vector<8x1xf32>
    %101 = vector.extract_strided_slice %45 {offsets = [0, 176], sizes = [8, 16], strides = [1, 1]} : vector<8x256xf32> to vector<8x16xf32>
    %102 = vector.broadcast %100 : vector<8x1xf32> to vector<8x16xf32>
    %103 = arith.mulf %102, %101 : vector<8x16xf32>
    %104 = arith.addf %99, %103 : vector<8x16xf32>
    %105 = vector.extract_strided_slice %1 {offsets = [0, 12], sizes = [8, 1], strides = [1, 1]} : vector<8x16xf32> to vector<8x1xf32>
    %106 = vector.extract_strided_slice %45 {offsets = [0, 192], sizes = [8, 16], strides = [1, 1]} : vector<8x256xf32> to vector<8x16xf32>
    %107 = vector.broadcast %105 : vector<8x1xf32> to vector<8x16xf32>
    %108 = arith.mulf %107, %106 : vector<8x16xf32>
    %109 = arith.addf %104, %108 : vector<8x16xf32>
    %110 = vector.extract_strided_slice %1 {offsets = [0, 13], sizes = [8, 1], strides = [1, 1]} : vector<8x16xf32> to vector<8x1xf32>
    %111 = vector.extract_strided_slice %45 {offsets = [0, 208], sizes = [8, 16], strides = [1, 1]} : vector<8x256xf32> to vector<8x16xf32>
    %112 = vector.broadcast %110 : vector<8x1xf32> to vector<8x16xf32>
    %113 = arith.mulf %112, %111 : vector<8x16xf32>
    %114 = arith.addf %109, %113 : vector<8x16xf32>
    %115 = vector.extract_strided_slice %1 {offsets = [0, 14], sizes = [8, 1], strides = [1, 1]} : vector<8x16xf32> to vector<8x1xf32>
    %116 = vector.extract_strided_slice %45 {offsets = [0, 224], sizes = [8, 16], strides = [1, 1]} : vector<8x256xf32> to vector<8x16xf32>
    %117 = vector.broadcast %115 : vector<8x1xf32> to vector<8x16xf32>
    %118 = arith.mulf %117, %116 : vector<8x16xf32>
    %119 = arith.addf %114, %118 : vector<8x16xf32>
    %120 = vector.extract_strided_slice %1 {offsets = [0, 15], sizes = [8, 1], strides = [1, 1]} : vector<8x16xf32> to vector<8x1xf32>
    %121 = vector.extract_strided_slice %45 {offsets = [0, 240], sizes = [8, 16], strides = [1, 1]} : vector<8x256xf32> to vector<8x16xf32>
    %122 = vector.broadcast %120 : vector<8x1xf32> to vector<8x16xf32>
    %123 = arith.mulf %122, %121 : vector<8x16xf32>
    %124 = arith.addf %119, %123 : vector<8x16xf32>
    %125 = vector.broadcast %3 : vector<8x1xf32> to vector<8x16xf32>
    %126 = arith.addf %124, %125 : vector<8x16xf32>
    %127 = arith.addf %126, %14 : vector<8x16xf32>
    %c0_24 = arith.constant 0 : index
    %c0_25 = arith.constant 0 : index
    %c0_26 = arith.constant 0 : index
    %128 = vector.load %arg7[%c0_24, %c0_25, %c0_26] : memref<1x8x16xf32, #tpu.memory_space<vmem>>, vector<1x8x16xf32>
    %129 = vector.shape_cast %128 : vector<1x8x16xf32> to vector<8x16xf32>
    %130 = vector.shape_cast %127 : vector<8x16xf32> to vector<1x8x16xf32>
    tpu.vector_store %arg7[%c0_24, %c0_25, %c0_26], %130 {strides = array<i32>} : memref<1x8x16xf32, #tpu.memory_space<vmem>>, vector<1x8x16xf32>,
    return
  }
  func.func @transform_0(%arg0: i32) -> (i32, i32, i32) {
    %c0_i32 = arith.constant 0 : i32
    %c0_i32_0 = arith.constant 0 : i32
    %c0_i32_1 = arith.constant 0 : i32
    return %arg0, %c0_i32, %c0_i32_0 : i32, i32, i32
  }
  func.func @transform_1(%arg0: i32) -> (i32, i32) {
    %c0_i32 = arith.constant 0 : i32
    %c0_i32_0 = arith.constant 0 : i32
    %c0_i32_1 = arith.constant 0 : i32
    return %c0_i32, %c0_i32_0 : i32, i32
  }
  func.func @transform_2(%arg0: i32) -> (i32, i32) {
    %c0_i32 = arith.constant 0 : i32
    %c0_i32_0 = arith.constant 0 : i32
    %c0_i32_1 = arith.constant 0 : i32
    return %c0_i32, %c0_i32_0 : i32, i32
  }
  func.func @transform_3(%arg0: i32) -> (i32, i32) {
    %c0_i32 = arith.constant 0 : i32
    %c0_i32_0 = arith.constant 0 : i32
    %c0_i32_1 = arith.constant 0 : i32
    return %c0_i32, %c0_i32_0 : i32, i32
  }
  func.func @transform_4(%arg0: i32) -> (i32, i32) {
    %c0_i32 = arith.constant 0 : i32
    %c0_i32_0 = arith.constant 0 : i32
    %c0_i32_1 = arith.constant 0 : i32
    return %c0_i32, %c0_i32_0 : i32, i32
  }
  func.func @transform_5(%arg0: i32) -> (i32, i32) {
    %c0_i32 = arith.constant 0 : i32
    %c0_i32_0 = arith.constant 0 : i32
    %c0_i32_1 = arith.constant 0 : i32
    return %c0_i32, %c0_i32_0 : i32, i32
  }
  func.func @transform_6(%arg0: i32) -> (i32, i32, i32) {
    %c0_i32 = arith.constant 0 : i32
    %c0_i32_0 = arith.constant 0 : i32
    %c0_i32_1 = arith.constant 0 : i32
    return %arg0, %c0_i32, %c0_i32_0 : i32, i32, i32
  }
}

</mosaic_0001>

<llo_original>
// kernel: tpu_custom_call.1
$region0: #{tpu_custom_call.1}
  #allocation0 [shape = 'u32[]', space=smem, size = 0x4, offset = 0x4, fixed_abs, tag = 'smem constant byte address 0x4 - core index']
  #allocation1 [shape = 'u32[72,128]{1,0:T(1,128)}', space=vmem, size = 0x9000, scoped, tag = 'internal scratch']
  %s0 = inlined_call_operand.vmem [shape: f32[2,4,256], index: 0, kind: input, shape index: {}]
  %s1 = inlined_call_operand.hbm [shape: f32[8,20], index: 1, kind: input, shape index: {}]
  %s2 = inlined_call_operand.hbm [shape: f32[8,16], index: 2, kind: input, shape index: {}]
  %s3 = inlined_call_operand.vmem [shape: f32[8,4], index: 3, kind: input, shape index: {}]
  %s4 = inlined_call_operand.hbm [shape: f32[5,256], index: 4, kind: input, shape index: {}]
  %s5 = inlined_call_operand.vmem [shape: f32[8,2], index: 5, kind: input, shape index: {}]
  %s6 = inlined_call_operand.hbm [shape: f32[2,8,16], index: 6, kind: output, shape index: {}]
  %s7 = sld [smem:[#allocation0]]
  $region69: #{tpu_custom_call.1} parent=0
    _
  %s9 = ssub.s32 1, %s7
  %s10 = scalar_select 0, %s9, %s7
  $region1: #{tpu_custom_call.1} parent=0
    #allocation2 [shape = 'u8[4096]{0}', space=vmem, size = 0x1000, scoped, tag = 'input window, operand 1, single buffered']
    #allocation3 [shape = 's32[2]{0}', space=sflag, size = 0x8, scoped, tag = 'scoped memory for tpu_custom_call.1']
    #allocation4 [shape = 's32[2]{0}', space=sflag, size = 0x8, scoped, tag = 'scoped memory for tpu_custom_call.1']
    #allocation5 [shape = 'u8[4096]{0}', space=vmem, size = 0x1000, scoped, tag = 'input window, operand 2, single buffered']
    #allocation6 [shape = 's32[1]{0}', space=sflag, size = 0x4, scoped, tag = 'scoped memory for tpu_custom_call.1']
    #allocation7 [shape = 'u8[8192]{0}', space=vmem, size = 0x2000, scoped, tag = 'input window, operand 4, single buffered']
    #allocation8 [shape = 'u8[8192]{0}', space=vmem, size = 0x2000, scoped, tag = 'output window, operand 0']
    %11 = vsyncpa [#allocation3], 0
    %12 = vsyncpa [#allocation6], 0
    %13 = vsyncpa [#allocation4], 0
    %s14 = scalar_lea.sflag [#allocation4], 1
    %15 = vsyncpa %s14, 0
    loop: start=0, step=1, limit=4
    $region2: #{tpu_custom_call.1} parent=1 // loop_pre_header
      _
    $region3: #{tpu_custom_call.1} parent=1 // loop_header
      %s17 = sphi 0, %s21
      %p18 = scmp.ge.s32.totalorder %s17, 4
      %s27 = sphi 0, %s29
      %s30 = sphi 0, %s27
      %s31 = sphi 0, %s30
      %s47 = sphi 0, %s31
      %s51 = sphi 0, %s51
      %s53 = sphi 0, %s51
      %s54 = sphi 0, %s53
      %s68 = sphi 0, %s54
      %s72 = sphi 0, %s72
      %s74 = sphi 0, %s72
      %s75 = sphi 0, %s74
      %s89 = sphi 0, %s75
      %s93 = sphi 0, %s93
      %s95 = sphi 0, %s93
      %s96 = sphi 0, %s95
      %s110 = sphi 0, %s96
      %s114 = sphi 0, %s114
      %s116 = sphi 0, %s114
      %s117 = sphi 0, %s116
      %s131 = sphi 0, %s117
      %s135 = sphi 0, %s135
      %s137 = sphi 0, %s135
      %s138 = sphi 0, %s137
      %s152 = sphi 0, %s138
      %s158 = sphi 0, %s160
      %s161 = sphi 0, %s158
      %s162 = sphi 0, %s161
      %s178 = sphi 0, %s162
    $region4: #{tpu_custom_call.1} parent=1 // loop_header_branch
      %20 = sbr.rel (%p18) target = $region8
    $region5: #{tpu_custom_call.1} parent=1 // loop_body
      %s22 = ssub.s32 %s17, 1
      %s23 = ssub.s32 %s17, 2
      %s24 = sadd.s32 %s17, 1
      %s25 = ssub.s32 %s17, %s24
      %p26 = scmp.eq.s32.totalorder %s25, 0
      %s28 = sadd.s32 %s27, 1
      %s29 = scalar_select %p26, %s27, %s28
      %p32 = pneg %p26
      %p33 = scmp.eq.s32.totalorder %s17, 1
      %p34 = por %p32, %p33
      %p35 = scmp.ne.s32.totalorder %s27, %s30
      %p36 = scmp.eq.s32.totalorder %s17, 0
      %p37 = por %p35, %p36
      %p38 = scmp.ne.s32.totalorder %s27, %s30
      %p39 = scmp.eq.s32.totalorder %s22, 1
      %p40 = por %p38, %p39
      %p41 = scmp.ne.s32.totalorder %s30, %s31
      %p42 = scmp.eq.s32.totalorder %s22, 0
      %p43 = por %p41, %p42
      %p44 = scmp.ne.s32.totalorder %s30, %s31
      %p45 = scmp.eq.s32.totalorder %s23, 1
      %p46 = por %p44, %p45
      %p48 = scmp.ne.s32.totalorder %s31, %s47
      %p49 = scmp.eq.s32.totalorder %s23, 0
      %p50 = por %p48, %p49
      %s52 = sadd.s32 %s51, 1
      %p55 = scmp.eq.s32.totalorder %s17, 1
      %p56 = scmp.ne.s32.totalorder %s51, %s53
      %p57 = scmp.eq.s32.totalorder %s17, 0
      %p58 = por %p56, %p57
      %p59 = scmp.ne.s32.totalorder %s51, %s53
      %p60 = scmp.eq.s32.totalorder %s22, 1
      %p61 = por %p59, %p60
      %p62 = scmp.ne.s32.totalorder %s53, %s54
      %p63 = scmp.eq.s32.totalorder %s22, 0
      %p64 = por %p62, %p63
      %p65 = scmp.ne.s32.totalorder %s53, %s54
      %p66 = scmp.eq.s32.totalorder %s23, 1
      %p67 = por %p65, %p66
      %p69 = scmp.ne.s32.totalorder %s54, %s68
      %p70 = scmp.eq.s32.totalorder %s23, 0
      %p71 = por %p69, %p70
      %s73 = sadd.s32 %s72, 1
      %p76 = scmp.eq.s32.totalorder %s17, 1
      %p77 = scmp.ne.s32.totalorder %s72, %s74
      %p78 = scmp.eq.s32.totalorder %s17, 0
      %p79 = por %p77, %p78
      %p80 = scmp.ne.s32.totalorder %s72, %s74
      %p81 = scmp.eq.s32.totalorder %s22, 1
      %p82 = por %p80, %p81
      %p83 = scmp.ne.s32.totalorder %s74, %s75
      %p84 = scmp.eq.s32.totalorder %s22, 0
      %p85 = por %p83, %p84
      %p86 = scmp.ne.s32.totalorder %s74, %s75
      %p87 = scmp.eq.s32.totalorder %s23, 1
      %p88 = por %p86, %p87
      %p90 = scmp.ne.s32.totalorder %s75, %s89
      %p91 = scmp.eq.s32.totalorder %s23, 0
      %p92 = por %p90, %p91
      %s94 = sadd.s32 %s93, 1
      %p97 = scmp.eq.s32.totalorder %s17, 1
      %p98 = scmp.ne.s32.totalorder %s93, %s95
      %p99 = scmp.eq.s32.totalorder %s17, 0
      %p100 = por %p98, %p99
      %p101 = scmp.ne.s32.totalorder %s93, %s95
      %p102 = scmp.eq.s32.totalorder %s22, 1
      %p103 = por %p101, %p102
      %p104 = scmp.ne.s32.totalorder %s95, %s96
      %p105 = scmp.eq.s32.totalorder %s22, 0
      %p106 = por %p104, %p105
      %p107 = scmp.ne.s32.totalorder %s95, %s96
      %p108 = scmp.eq.s32.totalorder %s23, 1
      %p109 = por %p107, %p108
      %p111 = scmp.ne.s32.totalorder %s96, %s110
      %p112 = scmp.eq.s32.totalorder %s23, 0
      %p113 = por %p111, %p112
      %s115 = sadd.s32 %s114, 1
      %p118 = scmp.eq.s32.totalorder %s17, 1
      %p119 = scmp.ne.s32.totalorder %s114, %s116
      %p120 = scmp.eq.s32.totalorder %s17, 0
      %p121 = por %p119, %p120
      %p122 = scmp.ne.s32.totalorder %s114, %s116
      %p123 = scmp.eq.s32.totalorder %s22, 1
      %p124 = por %p122, %p123
      %p125 = scmp.ne.s32.totalorder %s116, %s117
      %p126 = scmp.eq.s32.totalorder %s22, 0
      %p127 = por %p125, %p126
      %p128 = scmp.ne.s32.totalorder %s116, %s117
      %p129 = scmp.eq.s32.totalorder %s23, 1
      %p130 = por %p128, %p129
      %p132 = scmp.ne.s32.totalorder %s117, %s131
      %p133 = scmp.eq.s32.totalorder %s23, 0
      %p134 = por %p132, %p133
      %s136 = sadd.s32 %s135, 1
      %p139 = scmp.eq.s32.totalorder %s17, 1
      %p140 = scmp.ne.s32.totalorder %s135, %s137
      %p141 = scmp.eq.s32.totalorder %s17, 0
      %p142 = por %p140, %p141
      %p143 = scmp.ne.s32.totalorder %s135, %s137
      %p144 = scmp.eq.s32.totalorder %s22, 1
      %p145 = por %p143, %p144
      %p146 = scmp.ne.s32.totalorder %s137, %s138
      %p147 = scmp.eq.s32.totalorder %s22, 0
      %p148 = por %p146, %p147
      %p149 = scmp.ne.s32.totalorder %s137, %s138
      %p150 = scmp.eq.s32.totalorder %s23, 1
      %p151 = por %p149, %p150
      %p153 = scmp.ne.s32.totalorder %s138, %s152
      %p154 = scmp.eq.s32.totalorder %s23, 0
      %p155 = por %p153, %p154
      %s156 = ssub.s32 %s17, %s24
      %p157 = scmp.eq.s32.totalorder %s156, 0
      %s159 = sadd.s32 %s158, 1
      %s160 = scalar_select %p157, %s158, %s159
      %p163 = pneg %p157
      %p164 = scmp.eq.s32.totalorder %s17, 1
      %p165 = por %p163, %p164
      %p166 = scmp.ne.s32.totalorder %s158, %s161
      %p167 = scmp.eq.s32.totalorder %s17, 0
      %p168 = por %p166, %p167
      %p169 = scmp.ne.s32.totalorder %s158, %s161
      %p170 = scmp.eq.s32.totalorder %s22, 1
      %p171 = por %p169, %p170
      %p172 = scmp.ne.s32.totalorder %s161, %s162
      %p173 = scmp.eq.s32.totalorder %s22, 0
      %p174 = por %p172, %p173
      %p175 = scmp.ne.s32.totalorder %s161, %s162
      %p176 = scmp.eq.s32.totalorder %s23, 1
      %p177 = por %p175, %p176
      %p179 = scmp.ne.s32.totalorder %s162, %s178
      %p180 = scmp.eq.s32.totalorder %s23, 0
      %p181 = por %p179, %p180
      %p182 = scmp.le.s32.totalorder 1, %s17
      %p183 = scmp.lt.s32.totalorder %s17, 3
      %p184 = pnand %p182, %p183
      %p185 = pneg %p184
      // Predicated region
      $region9: #{tpu_custom_call.1} parent=5 // pred_check
        _
      $region10: #{tpu_custom_call.1} parent=5 // pred_check_branch
        %187 = sbr.rel (%p184) target = $region12
      $region11: #{tpu_custom_call.1} parent=5 // pred_region
        %s188 = ssub.s32 %s17, 1
        // Predicated region
        $region13: #{tpu_custom_call.1} parent=11 // pred_check
          %p189 = pneg %p64
        $region14: #{tpu_custom_call.1} parent=11 // pred_check_branch
          %191 = sbr.rel (%p189) target = $region16
        $region15: #{tpu_custom_call.1} parent=11 // pred_region
          %193 = vsyncadd [#allocation3], 0
          %s195 = sshll.u32 %s1, 4
          %s196 = int_to_ptr.hbm [resolvable:$true] %s195
          %s197 = sshll.u32 [#allocation2], 4
          %s198 = int_to_ptr.vmem [resolvable:$true] %s197
          %200 = dma.hbm_to_vmem [thread:$0]  %s196, 128, %s198, [#allocation3]
        $region16: #{tpu_custom_call.1} parent=11 // pred_fallthru
          _
        // Predicated region
        $region17: #{tpu_custom_call.1} parent=11 // pred_check
          %p201 = pneg %p85
        $region18: #{tpu_custom_call.1} parent=11 // pred_check_branch
          %203 = sbr.rel (%p201) target = $region20
        $region19: #{tpu_custom_call.1} parent=11 // pred_region
          %205 = vsyncadd [#allocation6], 0
          %s207 = sshll.u32 %s2, 4
          %s208 = int_to_ptr.hbm [resolvable:$true] %s207
          %s209 = sshll.u32 [#allocation5], 4
          %s210 = int_to_ptr.vmem [resolvable:$true] %s209
          %212 = dma.hbm_to_vmem [thread:$0]  %s208, 128, %s210, [#allocation6]
        $region20: #{tpu_custom_call.1} parent=11 // pred_fallthru
          _
        // Predicated region
        $region21: #{tpu_custom_call.1} parent=11 // pred_check
          %p213 = pneg %p106
        $region22: #{tpu_custom_call.1} parent=11 // pred_check_branch
          %215 = sbr.rel (%p213) target = $region24
        $region23: #{tpu_custom_call.1} parent=11 // pred_region
          _
        $region24: #{tpu_custom_call.1} parent=11 // pred_fallthru
          _
        // Predicated region
        $region25: #{tpu_custom_call.1} parent=11 // pred_check
          %p216 = pneg %p127
        $region26: #{tpu_custom_call.1} parent=11 // pred_check_branch
          %218 = sbr.rel (%p216) target = $region28
        $region27: #{tpu_custom_call.1} parent=11 // pred_region
          %220 = vsyncadd [#allocation6], 0
          %s222 = sshll.u32 %s4, 4
          %s223 = int_to_ptr.hbm [resolvable:$true] %s222
          %s224 = sshll.u32 [#allocation7], 4
          %s225 = int_to_ptr.vmem [resolvable:$true] %s224
          %227 = dma.hbm_to_vmem [thread:$0]  %s223, 256, %s225, [#allocation6]
        $region28: #{tpu_custom_call.1} parent=11 // pred_fallthru
          _
        // Predicated region
        $region29: #{tpu_custom_call.1} parent=11 // pred_check
          %p228 = pneg %p148
        $region30: #{tpu_custom_call.1} parent=11 // pred_check_branch
          %230 = sbr.rel (%p228) target = $region32
        $region31: #{tpu_custom_call.1} parent=11 // pred_region
          _
        $region32: #{tpu_custom_call.1} parent=11 // pred_fallthru
          _
      $region12: #{tpu_custom_call.1} parent=5 // pred_fallthru
        _
      %p231 = scmp.lt.s32.totalorder %s17, 2
      // Predicated region
      $region33: #{tpu_custom_call.1} parent=5 // pred_check
        %p232 = pneg %p231
      $region34: #{tpu_custom_call.1} parent=5 // pred_check_branch
        %234 = sbr.rel (%p232) target = $region36
      $region35: #{tpu_custom_call.1} parent=5 // pred_region
        // Predicated region
        $region37: #{tpu_custom_call.1} parent=35 // pred_check
          %p235 = pneg %p37
        $region38: #{tpu_custom_call.1} parent=35 // pred_check_branch
          %237 = sbr.rel (%p235) target = $region40
        $region39: #{tpu_custom_call.1} parent=35 // pred_region
          %p238 = scmp.lt.s32.totalorder %s17, 1
          %s239 = scalar_select %p238, %s17, 1
          %s240 = smul.addr %s239, 2
          %s241 = smul.addr %s240, 4
          %s242 = scalar_lea.vmem %s0, %s241
        $region40: #{tpu_custom_call.1} parent=35 // pred_fallthru
          _
      $region36: #{tpu_custom_call.1} parent=5 // pred_fallthru
        _
      %p243 = scmp.le.s32.totalorder 1, %s17
      %p244 = scmp.lt.s32.totalorder %s17, 3
      %p245 = pnand %p243, %p244
      %p246 = pneg %p245
      // Predicated region
      $region41: #{tpu_custom_call.1} parent=5 // pred_check
        _
      $region42: #{tpu_custom_call.1} parent=5 // pred_check_branch
        %248 = sbr.rel (%p245) target = $region44
      $region43: #{tpu_custom_call.1} parent=5 // pred_region
        %s249 = ssub.s32 %s17, 1
        // Predicated region
        $region45: #{tpu_custom_call.1} parent=43 // pred_check
          %p250 = pneg %p64
        $region46: #{tpu_custom_call.1} parent=43 // pred_check_branch
          %252 = sbr.rel (%p250) target = $region48
        $region47: #{tpu_custom_call.1} parent=43 // pred_region
          %254 = dma.done [#allocation3], 128
        $region48: #{tpu_custom_call.1} parent=43 // pred_fallthru
          _
        // Predicated region
        $region49: #{tpu_custom_call.1} parent=43 // pred_check
          %p255 = pneg %p85
        $region50: #{tpu_custom_call.1} parent=43 // pred_check_branch
          %257 = sbr.rel (%p255) target = $region52
        $region51: #{tpu_custom_call.1} parent=43 // pred_region
          %259 = dma.done [#allocation6], 128
        $region52: #{tpu_custom_call.1} parent=43 // pred_fallthru
          _
        // Predicated region
        $region53: #{tpu_custom_call.1} parent=43 // pred_check
          %p260 = pneg %p127
        $region54: #{tpu_custom_call.1} parent=43 // pred_check_branch
          %262 = sbr.rel (%p260) target = $region56
        $region55: #{tpu_custom_call.1} parent=43 // pred_region
          %264 = dma.done [#allocation6], 256
        $region56: #{tpu_custom_call.1} parent=43 // pred_fallthru
          _
        %p265 = scmp.lt.s32.totalorder %s22, 1
        %s266 = scalar_select %p265, %s22, 1
        %s267 = smul.addr %s266, 2
        %s268 = smul.addr %s267, 4
        %s269 = scalar_lea.vmem %s0, %s268
        %p270 = pneg %p43
        %p271 = pneg %p40
        %p272 = pneg %p64
        %p273 = pneg %p61
        %p274 = pneg %p85
        %p275 = pneg %p82
        %p276 = pneg %p106
        %p277 = pneg %p103
        %p278 = pneg %p127
        %p279 = pneg %p124
        %p280 = pneg %p148
        %p281 = pneg %p145
        %p282 = pneg %p174
        %p283 = pneg %p171
        %s284 = sand.u32 %s161, 1
        %s285 = scalar_lea.sflag [#allocation4], %s284
        %s286 = sand.u32 %s161, 1
        %s287 = smul.addr %s286, 8
        %s288 = scalar_lea.vmem [#allocation8], %s287
        %p289 = scmp.lt.s32.totalorder %s22, 1
        %s290 = scalar_select %p289, %s22, 1
        %s291 = smul.addr %s290, 2
        %s292 = smul.addr %s291, 4
        %s293 = scalar_lea.vmem %s0, %s292
        %v294 = vld [vmem:[#allocation2] sm:$0xff]
        %v295 = vld [vmem:[#allocation5] sm:$0xff]
        %v296 = vld [vmem:[%s5] sm:$0xff]
        %v297 = vld [vmem:[%s293] sm:$0xff]
        %v298 = vmul.f32 %v297, 0.5
        %v300 = vrot.slane %v297, 4
        %v302 = vmul.f32 %v300, 0.5
        %304 = vrot.lane.b32.xlu0 %v302, 112
        %v305 = vpop.permute.xlu0 %304
        %v307 = vadd.f32 %v298, %v305
        %v308 = vld [vmem:[%s3] sm:$0xff]
        %310 = vst [vmem:[#allocation1] ss:$2 sm:$0xff] %v307
        %v311 = vld.sshfl [vmem:[#allocation1] sm:$0xff pattern:$0x75316420]
        %312 = vrot.lane.b32.xlu0 %v311, 16
        %v313 = vpop.permute.xlu0 %312
        %vm314 = vcmask 31744
        %v316 = vsel %vm314, %v308, 0
        %vm318 = vcmask 1043456
        %v319 = vsel %vm318, %v313, 0
        %321 = vmatpush.msra.mxu0 0.0
        %322 = vmatpush.msra.mxu0 0.0
        %323 = vmatpush.msra.mxu0 0.0
        %324 = vmatpush.msra.mxu0 0.0
        %325 = vmatpush.msra.mxu0 0.0
        %326 = vmatpush.msra.mxu0 0.0
        %327 = vmatpush.msra.mxu0 0.0
        %328 = vmatpush.msra.mxu0 0.0
        %329 = vmatpush.msra.mxu0 0.0
        %330 = vmatpush.msra.mxu0 0.0
        %331 = vmatpush.msra.mxu0 0.0
        %332 = vmatpush.msra.mxu0 0.0
        %333 = vmatpush.msra.mxu0 0.0
        %334 = vmatpush.msra.mxu0 0.0
        %335 = vmatpush.msra.mxu0 0.0
        %336 = vmatpush.msra.mxu0 %v319
        %337 = vmatmul.f32.gmra.mxu0 %v316
        %v338 = vpop.f32.mrf.mxu0
        %v339 = vadd.f32 0.0, %v338
        %340 = vdwg.mxu0
        %341 = vst [vmem:[#allocation1] ss:$2 sm:$0xff] %v297
        %v342 = vld.sshfl [vmem:[#allocation1] sm:$0xff pattern:$0x75316420]
        %v343 = vld.sshfl [vmem:[#allocation1 + $0x8] sm:$0xff pattern:$0x75316420]
        %344 = vrot.lane.b32.xlu0 %v342, 2
        %v345 = vpop.permute.xlu0 %344
        %346 = vrot.lane.b32.xlu0 %v343, 2
        %v347 = vpop.permute.xlu0 %346
        %vm348 = vcmask 15360
        %v349 = vsel %vm348, %v345, %v347
        %v353 = vsel %vm348, 0.0, %v345
        %v354 = vsel %vm348, %v347, 0.0
        %v355 = vld [vmem:[#allocation7] ss:$8 sm:$0x3]
        %v357 = vperm.slane %v355, 0
        %v358 = vperm.slane %v355, 1
        %v361 = vmul.f32 %v353, %v357
        %v362 = vmul.f32 %v349, %v358
        %s363 = scalar_lea.vmem [#allocation7], 1
        %v364 = vld [vmem:[%s363] ss:$8 sm:$0x3]
        %v366 = vperm.slane %v364, 0
        %v367 = vperm.slane %v364, 1
        %368 = vrot.lane.b32.xlu0 %v366, 1
        %v369 = vpop.permute.xlu0 %368
        %370 = vrot.lane.b32.xlu0 %v367, 1
        %v371 = vpop.permute.xlu0 %370
        %vm372 = vcmask 7168
        %v373 = vsel %vm372, %v369, %v371
        %v377 = vmul.f32 %v353, %v369
        %v378 = vmul.f32 %v349, %v373
        %v379 = vmul.f32 %v354, %v371
        %s380 = scalar_lea.vmem [#allocation7], 3
        %v381 = vld [vmem:[%s380] ss:$8 sm:$0x3]
        %v383 = vperm.slane %v381, 0
        %v384 = vperm.slane %v381, 1
        %385 = vrot.lane.b32.xlu0 %v383, 3
        %v386 = vpop.permute.xlu0 %385
        %387 = vrot.lane.b32.xlu0 %v384, 3
        %v388 = vpop.permute.xlu0 %387
        %vm389 = vcmask 23552
        %v390 = vsel %vm389, %v386, %v388
        %v394 = vmul.f32 %v353, %v386
        %v395 = vmul.f32 %v349, %v390
        %v396 = vmul.f32 %v354, %v388
        %s397 = scalar_lea.vmem [#allocation7], 4
        %v398 = vld [vmem:[%s397] ss:$8 sm:$0x3]
        %v400 = vperm.slane %v398, 0
        %v401 = vperm.slane %v398, 1
        %402 = vrot.lane.b32.xlu0 %v400, 4
        %v403 = vpop.permute.xlu0 %402
        %404 = vrot.lane.b32.xlu0 %v401, 4
        %v405 = vpop.permute.xlu0 %404
        %v406 = vsel %vm314, %v403, %v405
        %v410 = vmul.f32 %v353, %v403
        %v411 = vmul.f32 %v349, %v406
        %v412 = vmul.f32 %v354, %v405
        %v416 = vrot.slane %v377, 4
        %v417 = vrot.slane %v378, 4
        %v418 = vrot.slane %v379, 4
        %419 = vrot.lane.b32.xlu0 %v416, 127
        %v420 = vpop.permute.xlu0 %419
        %421 = vrot.lane.b32.xlu0 %v417, 127
        %v422 = vpop.permute.xlu0 %421
        %423 = vrot.lane.b32.xlu0 %v418, 127
        %v424 = vpop.permute.xlu0 %423
        %vm425 = vcmask 1039360
        %v426 = vsel %vm425, %v420, %v422
        %v427 = vsel %vm425, %v422, %v424
        %432 = vrot.lane.b32.xlu0 %v353, 126
        %v433 = vpop.permute.xlu0 %432
        %434 = vrot.lane.b32.xlu0 %v349, 126
        %v435 = vpop.permute.xlu0 %434
        %436 = vrot.lane.b32.xlu0 %v354, 126
        %v437 = vpop.permute.xlu0 %436
        %vm438 = vcmask 1031168
        %v439 = vsel %vm438, %v433, %v435
        %v440 = vsel %vm438, %v435, %v437
        %v446 = vrot.slane %v394, 4
        %v447 = vrot.slane %v395, 4
        %v448 = vrot.slane %v396, 4
        %449 = vrot.lane.b32.xlu0 %v446, 125
        %v450 = vpop.permute.xlu0 %449
        %451 = vrot.lane.b32.xlu0 %v447, 125
        %v452 = vpop.permute.xlu0 %451
        %453 = vrot.lane.b32.xlu0 %v448, 125
        %v454 = vpop.permute.xlu0 %453
        %vm455 = vcmask 1022976
        %v456 = vsel %vm455, %v450, %v452
        %v457 = vsel %vm455, %v452, %v454
        %463 = vrot.lane.b32.xlu0 %v410, 124
        %v464 = vpop.permute.xlu0 %463
        %465 = vrot.lane.b32.xlu0 %v411, 124
        %v466 = vpop.permute.xlu0 %465
        %467 = vrot.lane.b32.xlu0 %v412, 124
        %v468 = vpop.permute.xlu0 %467
        %vm469 = vcmask 1014784
        %v470 = vsel %vm469, %v464, %v466
        %v471 = vsel %vm469, %v466, %v468
        %v472 = vsel %vm318, %v361, %v426
        %v473 = vsel %vm318, %v362, %v427
        %v474 = vsel %vm318, %v439, %v456
        %v475 = vsel %vm318, %v440, %v457
        %477 = vset.pattern.permute.xlu0 0
        %478 = vperm.xlu0 %477, %v296
        %v479 = vpop.permute.xlu0 %478
        %vm481 = vcmask 162816
        %v483 = vsel %vm481, %v294, 0
        %v485 = vsel %vm318, %v470, 0
        %v487 = vsel %vm318, %v471, 0
        %489 = vmatpush.msra.mxu0 0.0
        %490 = vmatpush.msra.mxu0 0.0
        %491 = vmatpush.msra.mxu0 0.0
        %492 = vmatpush.msra.mxu0 0.0
        %493 = vmatpush.msra.mxu0 0.0
        %494 = vmatpush.msra.mxu0 0.0
        %495 = vmatpush.msra.mxu0 0.0
        %496 = vmatpush.msra.mxu0 0.0
        %497 = vmatpush.msra.mxu0 0.0
        %498 = vmatpush.msra.mxu0 0.0
        %499 = vmatpush.msra.mxu0 0.0
        %500 = vmatpush.msra.mxu0 0.0
        %501 = vmatpush.msra.mxu0 0.0
        %502 = vmatpush.msra.mxu0 %v485
        %503 = vmatpush.msra.mxu0 %v474
        %504 = vmatpush.msra.mxu0 %v472
        %505 = vmatmul.f32.gmra.mxu0 %v483
        %v506 = vpop.f32.mrf.mxu0
        %v507 = vadd.f32 %v479, %v506
        %508 = vdwg.mxu0
        %509 = vmatpush.msra.mxu0 0.0
        %510 = vmatpush.msra.mxu0 0.0
        %511 = vmatpush.msra.mxu0 0.0
        %512 = vmatpush.msra.mxu0 0.0
        %513 = vmatpush.msra.mxu0 0.0
        %514 = vmatpush.msra.mxu0 0.0
        %515 = vmatpush.msra.mxu0 0.0
        %516 = vmatpush.msra.mxu0 0.0
        %517 = vmatpush.msra.mxu0 0.0
        %518 = vmatpush.msra.mxu0 0.0
        %519 = vmatpush.msra.mxu0 0.0
        %520 = vmatpush.msra.mxu0 0.0
        %521 = vmatpush.msra.mxu0 0.0
        %522 = vmatpush.msra.mxu0 %v487
        %523 = vmatpush.msra.mxu0 %v475
        %524 = vmatpush.msra.mxu0 %v473
        %525 = vmatmul.f32.gmra.mxu0 %v483
        %v526 = vpop.f32.mrf.mxu0
        %v527 = vadd.f32 %v479, %v526
        %528 = vdwg.mxu0
        %vm529 = vcmp.gt.f32.partialorder %v507, 0.0
        %vm530 = vcmp.gt.f32.partialorder %v527, 0.0
        %v531 = vmin.f32 %v507, 0.0
        %v532 = vmin.f32 %v527, 0.0
        %v533 = vmul.f32 %v531, 1.442695
        %v534 = vpow.pop %v533
        %v535 = vmul.f32 %v532, 1.442695
        %v536 = vpow.pop %v535
        %v537 = vsub.f32 %v534, 1.0
        %v538 = vsub.f32 %v536, 1.0
        %v539 = vsel %vm529, %v507, %v537
        %v540 = vsel %vm530, %v527, %v538
        %542 = vset.pattern.permute.xlu0 0
        %543 = vperm.xlu0 %542, %v295
        %v544 = vpop.permute.xlu0 %543
        %v546 = vmul.f32 %v544, %v539
        %547 = vset.pattern.permute.xlu0 1
        %548 = vperm.xlu0 %547, %v295
        %v549 = vpop.permute.xlu0 %548
        %v551 = vmul.f32 %v549, %v539
        %553 = vrot.lane.b32.xlu0 %v551, 112
        %v554 = vpop.permute.xlu0 %553
        %v556 = vadd.f32 %v546, %v554
        %557 = vset.pattern.permute.xlu0 2
        %558 = vperm.xlu0 %557, %v295
        %v559 = vpop.permute.xlu0 %558
        %v561 = vmul.f32 %v559, %v539
        %563 = vrot.lane.b32.xlu0 %v561, 96
        %v564 = vpop.permute.xlu0 %563
        %v566 = vadd.f32 %v556, %v564
        %567 = vset.pattern.permute.xlu0 3
        %568 = vperm.xlu0 %567, %v295
        %v569 = vpop.permute.xlu0 %568
        %v571 = vmul.f32 %v569, %v539
        %573 = vrot.lane.b32.xlu0 %v571, 80
        %v574 = vpop.permute.xlu0 %573
        %v576 = vadd.f32 %v566, %v574
        %577 = vset.pattern.permute.xlu0 4
        %578 = vperm.xlu0 %577, %v295
        %v579 = vpop.permute.xlu0 %578
        %v581 = vmul.f32 %v579, %v539
        %583 = vrot.lane.b32.xlu0 %v581, 64
        %v584 = vpop.permute.xlu0 %583
        %v586 = vadd.f32 %v576, %v584
        %587 = vset.pattern.permute.xlu0 5
        %588 = vperm.xlu0 %587, %v295
        %v589 = vpop.permute.xlu0 %588
        %v591 = vmul.f32 %v589, %v539
        %593 = vrot.lane.b32.xlu0 %v591, 48
        %v594 = vpop.permute.xlu0 %593
        %v596 = vadd.f32 %v586, %v594
        %597 = vset.pattern.permute.xlu0 6
        %598 = vperm.xlu0 %597, %v295
        %v599 = vpop.permute.xlu0 %598
        %v601 = vmul.f32 %v599, %v539
        %603 = vrot.lane.b32.xlu0 %v601, 32
        %v604 = vpop.permute.xlu0 %603
        %v606 = vadd.f32 %v596, %v604
        %607 = vset.pattern.permute.xlu0 7
        %608 = vperm.xlu0 %607, %v295
        %v609 = vpop.permute.xlu0 %608
        %v611 = vmul.f32 %v609, %v539
        %613 = vrot.lane.b32.xlu0 %v611, 16
        %v614 = vpop.permute.xlu0 %613
        %v616 = vadd.f32 %v606, %v614
        %617 = vset.pattern.permute.xlu0 8
        %618 = vperm.xlu0 %617, %v295
        %v619 = vpop.permute.xlu0 %618
        %v621 = vmul.f32 %v619, %v540
        %v622 = vadd.f32 %v616, %v621
        %623 = vset.pattern.permute.xlu0 9
        %624 = vperm.xlu0 %623, %v295
        %v625 = vpop.permute.xlu0 %624
        %v627 = vmul.f32 %v625, %v540
        %629 = vrot.lane.b32.xlu0 %v627, 112
        %v630 = vpop.permute.xlu0 %629
        %v632 = vadd.f32 %v622, %v630
        %633 = vset.pattern.permute.xlu0 10
        %634 = vperm.xlu0 %633, %v295
        %v635 = vpop.permute.xlu0 %634
        %v637 = vmul.f32 %v635, %v540
        %639 = vrot.lane.b32.xlu0 %v637, 96
        %v640 = vpop.permute.xlu0 %639
        %v642 = vadd.f32 %v632, %v640
        %643 = vset.pattern.permute.xlu0 11
        %644 = vperm.xlu0 %643, %v295
        %v645 = vpop.permute.xlu0 %644
        %v647 = vmul.f32 %v645, %v540
        %649 = vrot.lane.b32.xlu0 %v647, 80
        %v650 = vpop.permute.xlu0 %649
        %v652 = vadd.f32 %v642, %v650
        %653 = vset.pattern.permute.xlu0 12
        %654 = vperm.xlu0 %653, %v295
        %v655 = vpop.permute.xlu0 %654
        %v657 = vmul.f32 %v655, %v540
        %659 = vrot.lane.b32.xlu0 %v657, 64
        %v660 = vpop.permute.xlu0 %659
        %v662 = vadd.f32 %v652, %v660
        %663 = vset.pattern.permute.xlu0 13
        %664 = vperm.xlu0 %663, %v295
        %v665 = vpop.permute.xlu0 %664
        %v667 = vmul.f32 %v665, %v540
        %669 = vrot.lane.b32.xlu0 %v667, 48
        %v670 = vpop.permute.xlu0 %669
        %v672 = vadd.f32 %v662, %v670
        %673 = vset.pattern.permute.xlu0 14
        %674 = vperm.xlu0 %673, %v295
        %v675 = vpop.permute.xlu0 %674
        %v677 = vmul.f32 %v675, %v540
        %679 = vrot.lane.b32.xlu0 %v677, 32
        %v680 = vpop.permute.xlu0 %679
        %v682 = vadd.f32 %v672, %v680
        %683 = vset.pattern.permute.xlu0 15
        %684 = vperm.xlu0 %683, %v295
        %v685 = vpop.permute.xlu0 %684
        %v687 = vmul.f32 %v685, %v540
        %689 = vrot.lane.b32.xlu0 %v687, 16
        %v690 = vpop.permute.xlu0 %689
        %v692 = vadd.f32 %v682, %v690
        %693 = vset.pattern.permute.xlu0 1
        %694 = vperm.xlu0 %693, %v296
        %v695 = vpop.permute.xlu0 %694
        %v697 = vadd.f32 %v692, %v695
        %v698 = vadd.f32 %v697, %v339
        %vm699 = vcmask 130048
        %700 = vst.msk [vmem:[%s288] sm:$0xff] %vm699, %v698
        %s701 = sand.u32 %s161, 1
        %s702 = scalar_lea.sflag [#allocation4], %s701
        %s703 = sand.u32 %s161, 1
        %s704 = smul.addr %s703, 8
        %s705 = scalar_lea.vmem [#allocation8], %s704
        // Predicated region
        $region57: #{tpu_custom_call.1} parent=43 // pred_check
          %p706 = pneg %p171
        $region58: #{tpu_custom_call.1} parent=43 // pred_check_branch
          %708 = sbr.rel (%p706) target = $region60
        $region59: #{tpu_custom_call.1} parent=43 // pred_region
          %710 = vsyncadd %s702, 0
          %s711 = smul.addr %s22, 8
          %s712 = scalar_lea.hbm %s6, %s711
          %s714 = sshll.u32 %s705, 4
          %s715 = int_to_ptr.vmem [resolvable:$true] %s714
          %s716 = sshll.u32 %s712, 4
          %s717 = int_to_ptr.hbm [resolvable:$true] %s716
          %719 = dma.vmem_to_hbm [thread:$0]  %s715, 128, %s717, %s702
        $region60: #{tpu_custom_call.1} parent=43 // pred_fallthru
          _
      $region44: #{tpu_custom_call.1} parent=5 // pred_fallthru
        _
      %p720 = scmp.le.s32.totalorder 2, %s17
      // Predicated region
      $region61: #{tpu_custom_call.1} parent=5 // pred_check
        %p721 = pneg %p720
      $region62: #{tpu_custom_call.1} parent=5 // pred_check_branch
        %723 = sbr.rel (%p721) target = $region64
      $region63: #{tpu_custom_call.1} parent=5 // pred_region
        %s724 = ssub.s32 %s17, 2
        // Predicated region
        $region65: #{tpu_custom_call.1} parent=63 // pred_check
          %p725 = pneg %p177
        $region66: #{tpu_custom_call.1} parent=63 // pred_check_branch
          %727 = sbr.rel (%p725) target = $region68
        $region67: #{tpu_custom_call.1} parent=63 // pred_region
          %s728 = sand.u32 %s162, 1
          %s729 = scalar_lea.sflag [#allocation4], %s728
          %s730 = sand.u32 %s162, 1
          %s731 = smul.addr %s730, 8
          %s732 = scalar_lea.vmem [#allocation8], %s731
          %734 = dma.done %s729, 128
        $region68: #{tpu_custom_call.1} parent=63 // pred_fallthru
          _
      $region64: #{tpu_custom_call.1} parent=5 // pred_fallthru
        _
    $region6: #{tpu_custom_call.1} parent=1 // loop_footer
      %s21 = sadd.s32 1, %s17
    $region7: #{tpu_custom_call.1} parent=1 // loop_footer_branch
      %16 = sbr.rel target = $region3
    $region8: #{tpu_custom_call.1} parent=1 // loop_exit
      _
    %735 = vsyncpa [#allocation3], 1
    %s736 = scalar_lea.sflag [#allocation3], 1
    %737 = vsyncpa %s736, 1
    %738 = vsyncpa [#allocation6], 1
    %739 = vsyncpa [#allocation4], 1
    %s740 = scalar_lea.sflag [#allocation4], 1
    %741 = vsyncpa %s740, 1

</llo_original>
